<compile_context>
chip_gen: v6e
topology: v6e:2x2x1
jax: 0.10.0
libtpu: 0.0.40
codegen_flags: <defaults>
</compile_context>

<pallas_src>
import math
import jax
import jax.numpy as jnp
from jax import lax
from jax.experimental import pallas as pl
from jax.experimental.pallas import tpu as pltpu


# ----------------------------- kernel ---------------------------------------


def _encdec_kernel(x_ref, enc_w_ref, be_ref, wdt_ref, bd_ref, out_ref):
    # x_ref:     (TB, N)  batch tile of inputs (streamed, double-buffered)
    # enc_w_ref: (n, N)   encoder weight, PyTorch layout (lane-dense, resident)
    # be_ref:    (1, n)   encoder bias (resident)
    # wdt_ref:   (n, N)   decoder weight pre-transposed at init (lane-dense, resident)
    # bd_ref:    (1, N)   decoder bias (resident)
    # out_ref:   (TB, N)  reconstruction tile (streamed, double-buffered)
    x = x_ref[...]

    # enc = x @ enc_w.T : contract x dim 1 against enc_w dim 1 on the MXU.
    # Keeping enc_w in (n, N) keeps N on the lane axis for the resident weight
    # (no 10 -> 128 lane padding).  Verified to lower without error; if MLIR
    # shows a per-step relayout of the resident weight, swap operand roles at init.
    enc = lax.dot_general(
        x, enc_w_ref[...],
        dimension_numbers=(((1,), (1,)), ((), ())),
        preferred_element_type=jnp.float32,
    ) + be_ref[...].astype(jnp.float32)

    # Decoder matmul + bias, f32 accumulation, cast only at the final store.
    # TODO(synk): on v7x (64 MiB VMEM) chunk this matmul + store over ~2048-lane
    # slices of wdt/bd/out to avoid the full (TB, N) f32 temporary; today the TB
    # budget simply accounts for it instead.
    out = jnp.dot(
        enc.astype(wdt_ref.dtype), wdt_ref[...],
        preferred_element_type=jnp.float32,
    ) + bd_ref[...].astype(jnp.float32)

    out_ref[...] = out.astype(out_ref.dtype)


# ----------------------------- wrapper ---------------------------------------


def _round_up(x, m):
    return ((x + m - 1) // m) * m


def prepare_params(enc_w, enc_b, dec_w, dec_b, param_dtype=None):
    """One-time parameter preparation (call at init, NOT per forward call).

    enc_w: (n, N) torch encoder.weight     enc_b: (n,)
    dec_w: (N, n) torch decoder.weight     dec_b: (N,)
    Returns (enc_w, enc_b_2d, dec_w_t, dec_b_2d) with the decoder weight
    transposed once to the lane-dense (n, N) orientation.
    """
    n, N = enc_w.shape
    dec_w_t = jnp.swapaxes(dec_w, 0, 1)        # (n, N), done once at init
    enc_b_2d = enc_b.reshape(1, n)
    dec_b_2d = dec_b.reshape(1, N)
    if param_dtype is not None:
        enc_w = enc_w.astype(param_dtype)
        dec_w_t = dec_w_t.astype(param_dtype)
        enc_b_2d = enc_b_2d.astype(param_dtype)
        dec_b_2d = dec_b_2d.astype(param_dtype)
    return enc_w, enc_b_2d, dec_w_t, dec_b_2d


def _choose_tb(B, N, x_item, out_item, vmem_cap, sublane_q):
    # Bytes of VMEM per batch row: double-buffered x + double-buffered out +
    # the f32 decoder-output temporary inside the kernel.
    per_row = N * (2 * x_item + 2 * out_item + 4)
    budget = vmem_cap // 3
    budget_rows = max(sublane_q, int(budget // max(per_row, 1)))
    hw_cap = 256 if vmem_cap >= (100 << 20) else 128   # bigger tiles on 128 MiB parts
    tb = min(hw_cap, budget_rows, _round_up(B, sublane_q))
    tb = max(sublane_q, (tb // sublane_q) * sublane_q)
    # v7x-like parts (64 MiB VMEM, 2 TensorCores): keep >= 2 grid steps so the
    # "parallel" batch axis actually splits across cores.  On v5e/v6e (1 TC)
    # prefer minimal padding instead.
    if vmem_cap < (100 << 20) and B > 2 * sublane_q and tb >= B:
        tb = max(sublane_q, _round_up(-(-B // 2), sublane_q))
    return tb


def encoder_decoder_forward(x, enc_w, enc_b_2d, dec_w_t, dec_b_2d,
                            *, block_b=None, out_dtype=None,
                            vmem_limit_bytes=None):
    """Forward pass of EncoderDecoder / NRBS.

    x:        (B, N)
    enc_w:    (n, N)  encoder weight (PyTorch layout)
    enc_b_2d: (1, n)  from prepare_params
    dec_w_t:  (n, N)  decoder weight, transposed once at init
    dec_b_2d: (1, N)
    out_dtype: output dtype (default: x.dtype; pass bf16 if downstream tolerates
               it to cut the output stream in half — kernel still accumulates f32).
    """
    B, N = x.shape
    n = enc_w.shape[0]
    out_dtype = jnp.dtype(x.dtype) if out_dtype is None else jnp.dtype(out_dtype)

    x_item = jnp.dtype(x.dtype).itemsize
    out_item = out_dtype.itemsize
    w_item = jnp.dtype(enc_w.dtype).itemsize
    sublane_q = 8 if min(x_item, out_item) >= 4 else 16   # 16-bit tiles pack 16 rows

    try:
        vmem_cap = int(pltpu.get_tpu_info().vmem_capacity_bytes)
    except Exception:
        vmem_cap = 64 << 20            # conservative fallback (v7x-sized VMEM)

    if block_b is None:
        TB = _choose_tb(B, N, x_item, out_item, vmem_cap, sublane_q)
    else:
        TB = int(block_b)
    assert TB % sublane_q == 0, (
        f"batch tile {TB} must be a multiple of {sublane_q} sublanes for these dtypes")

    if vmem_limit_bytes is None:
        vmem_limit_bytes = int(vmem_cap * 3 // 4)   # 96 MiB on v5e/v6e, 48 MiB on v7x

    # Pad batch so the grid covers it exactly (extra zero rows sliced off below).
    B_pad = _round_up(B, TB)
    if B_pad != B:
        x = jnp.pad(x, ((0, B_pad - B), (0, 0)))

    grid = (B_pad // TB,)

    # TODO(synk): for the real N = 121*121 = 14641, pad N to a multiple of 128
    # once at parameter init (weights/biases) and keep activations padded
    # end-to-end to avoid masked tail stores; not done here to keep the wrapper
    # free of extra per-call passes over x.
    flops = 4 * B_pad * N * n                                    # two matmuls
    bytes_accessed = (B_pad * N * (x_item + out_item)            # x in, out back
                      + 2 * n * N * w_item                       # both weights
                      + (n + N) * w_item)                        # biases

    out_pad = pl.pallas_call(
        _encdec_kernel,
        out_shape=jax.ShapeDtypeStruct((B_pad, N), out_dtype),
        grid_spec=pltpu.PrefetchScalarGridSpec(
            num_scalar_prefetch=0,
            grid=grid,
            in_specs=[
                pl.BlockSpec((TB, N), lambda i: (i, 0)),   # x: streamed per batch tile
                pl.BlockSpec((n, N), lambda i: (0, 0)),    # enc_w: resident in VMEM
                pl.BlockSpec((1, n), lambda i: (0, 0)),    # enc_b: resident
                pl.BlockSpec((n, N), lambda i: (0, 0)),    # dec_w.T: resident
                pl.BlockSpec((1, N), lambda i: (0, 0)),    # dec_b: resident
            ],
            out_specs=pl.BlockSpec((TB, N), lambda i: (i, 0)),
        ),
        compiler_params=pltpu.CompilerParams(
            dimension_semantics=("parallel",),   # batch tiles split across TCs (v7x)
            vmem_limit_bytes=vmem_limit_bytes,
        ),
        cost_estimate=pl.CostEstimate(
            flops=flops, transcendentals=0, bytes_accessed=bytes_accessed),
    )(x, enc_w, enc_b_2d, dec_w_t, dec_b_2d)

    return out_pad[:B] if B_pad != B else out_pad


# ----------------------------- self-test --------------------------------------


def _torch_linear_init(key, out_features, in_features):
    """Deterministic init mimicking torch.nn.Linear defaults:
    weight, bias ~ U(-1/sqrt(in_features), 1/sqrt(in_features))."""
    kw, kb = jax.random.split(key)
    bound = 1.0 / math.sqrt(in_features)
    w = jax.random.uniform(kw, (out_features, in_features), jnp.float32,
                           minval=-bound, maxval=bound)
    b = jax.random.uniform(kb, (out_features,), jnp.float32,
                           minval=-bound, maxval=bound)
    return w, b


if __name__ == "__main__":
    # Small shapes consistent with the module (original N = 121*121 = 14641, n = 10).
    B, N, n = 36, 1024, 10

    key = jax.random.PRNGKey(0)
    k_x, k_enc, k_dec = jax.random.split(key, 3)

    x = jax.random.normal(k_x, (B, N), jnp.float32)
    enc_w, enc_b = _torch_linear_init(k_enc, n, N)   # encoder: Linear(N, n)
    dec_w, dec_b = _torch_linear_init(k_dec, N, n)   # decoder: Linear(n, N)

    # Pure-JAX reference (same semantics as NRBS.forward).
    ref = (x @ enc_w.T + enc_b) @ dec_w.T + dec_b

    # One-time parameter prep (transpose + reshapes hoisted out of the call path).
    params = prepare_params(enc_w, enc_b, dec_w, dec_b)

    # Exercise explicit batch tiling + non-divisible-batch padding:
    # B=36 -> padded to 48, TB=16, grid=(3,).
    out = encoder_decoder_forward(x, *params, block_b=16)
    out = jax.block_until_ready(out)
    assert out.shape == (B, N)
    assert out.dtype == x.dtype
    assert jnp.allclose(out, ref, atol=1e-4, rtol=1e-4)

    # Default (auto) tile-size path: TB <= round_up(B, 8), VMEM-capacity aware.
    out2 = jax.block_until_ready(encoder_decoder_forward(x, *params))
    assert jnp.allclose(out2, ref, atol=1e-4, rtol=1e-4)

    # Optional bf16 output stream (f32 inputs + f32 accumulation kept).
    out_bf16 = jax.block_until_ready(
        encoder_decoder_forward(x, *params, block_b=16, out_dtype=jnp.bfloat16))
    assert out_bf16.dtype == jnp.bfloat16
    assert jnp.allclose(out_bf16.astype(jnp.float32), ref, atol=2e-2, rtol=2e-2)

    print("KERNEL_OK")
</pallas_src>

<mosaic_0001>
module attributes {stable_mosaic.version = 11 : i64} {
  func.func @_encdec_kernel(%arg0: i32, %arg1: memref<16x1024xf32, #tpu.memory_space<vmem>>, %arg2: memref<10x1024xf32, #tpu.memory_space<vmem>>, %arg3: memref<1x10xf32, #tpu.memory_space<vmem>>, %arg4: memref<10x1024xf32, #tpu.memory_space<vmem>>, %arg5: memref<1x1024xf32, #tpu.memory_space<vmem>>, %arg6: memref<16x1024xf32, #tpu.memory_space<vmem>>) attributes {dimension_semantics = [#tpu.dimension_semantics<parallel>], iteration_bounds = array<i64: 3>, scalar_prefetch = 0 : i64, scratch_operands = 0 : i64, tpu.core_type = #tpu.core_type<tc>, window_params = [{transform_indices = @transform_0, window_bounds = array<i64: 16, 1024>}, {pipeline_mode = #tpu.pipeline_mode<synchronous>, transform_indices = @transform_1, window_bounds = array<i64: 10, 1024>}, {pipeline_mode = #tpu.pipeline_mode<synchronous>, transform_indices = @transform_2, window_bounds = array<i64: 1, 10>}, {pipeline_mode = #tpu.pipeline_mode<synchronous>, transform_indices = @transform_3, window_bounds = array<i64: 10, 1024>}, {pipeline_mode = #tpu.pipeline_mode<synchronous>, transform_indices = @transform_4, window_bounds = array<i64: 1, 1024>}, {transform_indices = @transform_5, window_bounds = array<i64: 16, 1024>}]} {
    %c0 = arith.constant 0 : index
    %c0_0 = arith.constant 0 : index
    %0 = vector.load %arg1[%c0, %c0_0] : memref<16x1024xf32, #tpu.memory_space<vmem>>, vector<16x1024xf32>
    %c0_1 = arith.constant 0 : index
    %c0_2 = arith.constant 0 : index
    %1 = vector.load %arg2[%c0_1, %c0_2] : memref<10x1024xf32, #tpu.memory_space<vmem>>, vector<10x1024xf32>
    %cst = arith.constant dense<0.000000e+00> : vector<16x10xf32>
    %2 = tpu.matmul %0, %1, %cst {dimension_numbers = #tpu.dot_dimension_numbers<[1], [1], [0], [0], [0, 0, 1, 0], [], []>} : vector<16x1024xf32>, vector<10x1024xf32>, vector<16x10xf32> -> vector<16x10xf32>
    %c0_3 = arith.constant 0 : index
    %c0_4 = arith.constant 0 : index
    %3 = vector.load %arg3[%c0_3, %c0_4] : memref<1x10xf32, #tpu.memory_space<vmem>>, vector<1x10xf32>
    %4 = vector.broadcast %3 : vector<1x10xf32> to vector<16x10xf32>
    %5 = arith.addf %2, %4 : vector<16x10xf32>
    %c0_5 = arith.constant 0 : index
    %c0_6 = arith.constant 0 : index
    %6 = vector.load %arg4[%c0_5, %c0_6] : memref<10x1024xf32, #tpu.memory_space<vmem>>, vector<10x1024xf32>
    %cst_7 = arith.constant dense<0.000000e+00> : vector<16x1024xf32>
    %7 = tpu.matmul %5, %6, %cst_7 {dimension_numbers = #tpu.dot_dimension_numbers<[1], [0], [0], [1], [0, 0, 1, 1], [], []>} : vector<16x10xf32>, vector<10x1024xf32>, vector<16x1024xf32> -> vector<16x1024xf32>
    %c0_8 = arith.constant 0 : index
    %c0_9 = arith.constant 0 : index
    %8 = vector.load %arg5[%c0_8, %c0_9] : memref<1x1024xf32, #tpu.memory_space<vmem>>, vector<1x1024xf32>
    %9 = vector.broadcast %8 : vector<1x1024xf32> to vector<16x1024xf32>
    %10 = arith.addf %7, %9 : vector<16x1024xf32>
    %c0_10 = arith.constant 0 : index
    %c0_11 = arith.constant 0 : index
    %11 = vector.load %arg6[%c0_10, %c0_11] : memref<16x1024xf32, #tpu.memory_space<vmem>>, vector<16x1024xf32>
    tpu.vector_store %arg6[%c0_10, %c0_11], %10 {strides = array<i32>} : memref<16x1024xf32, #tpu.memory_space<vmem>>, vector<16x1024xf32>,
    return
  }
  func.func @transform_0(%arg0: i32) -> (i32, i32) {
    %c0_i32 = arith.constant 0 : i32
    %c0_i32_0 = arith.constant 0 : i32
    return %arg0, %c0_i32 : i32, i32
  }
  func.func @transform_1(%arg0: i32) -> (i32, i32) {
    %c0_i32 = arith.constant 0 : i32
    %c0_i32_0 = arith.constant 0 : i32
    %c0_i32_1 = arith.constant 0 : i32
    return %c0_i32, %c0_i32_0 : i32, i32
  }
  func.func @transform_2(%arg0: i32) -> (i32, i32) {
    %c0_i32 = arith.constant 0 : i32
    %c0_i32_0 = arith.constant 0 : i32
    %c0_i32_1 = arith.constant 0 : i32
    return %c0_i32, %c0_i32_0 : i32, i32
  }
  func.func @transform_3(%arg0: i32) -> (i32, i32) {
    %c0_i32 = arith.constant 0 : i32
    %c0_i32_0 = arith.constant 0 : i32
    %c0_i32_1 = arith.constant 0 : i32
    return %c0_i32, %c0_i32_0 : i32, i32
  }
  func.func @transform_4(%arg0: i32) -> (i32, i32) {
    %c0_i32 = arith.constant 0 : i32
    %c0_i32_0 = arith.constant 0 : i32
    %c0_i32_1 = arith.constant 0 : i32
    return %c0_i32, %c0_i32_0 : i32, i32
  }
  func.func @transform_5(%arg0: i32) -> (i32, i32) {
    %c0_i32 = arith.constant 0 : i32
    %c0_i32_0 = arith.constant 0 : i32
    return %arg0, %c0_i32 : i32, i32
  }
}

</mosaic_0001>

<llo_original>
// kernel: tpu_custom_call.1
$region0: #{tpu_custom_call.1}
  #allocation0 [shape = 'u32[]', space=smem, size = 0x4, offset = 0x4, fixed_abs, tag = 'smem constant byte address 0x4 - core index']
  #allocation1 [shape = 'u32[144,128]{1,0:T(1,128)}', space=vmem, size = 0x12000, scoped, tag = 'internal scratch']
  %s0 = inlined_call_operand.hbm [shape: f32[48,1024], index: 0, kind: input, shape index: {}]
  %s1 = inlined_call_operand.hbm [shape: f32[10,1024], index: 1, kind: input, shape index: {}]
  %s2 = inlined_call_operand.vmem [shape: f32[1,10], index: 2, kind: input, shape index: {}]
  %s3 = inlined_call_operand.hbm [shape: f32[10,1024], index: 3, kind: input, shape index: {}]
  %s4 = inlined_call_operand.hbm [shape: f32[1,1024], index: 4, kind: input, shape index: {}]
  %s5 = inlined_call_operand.hbm [shape: f32[48,1024], index: 5, kind: output, shape index: {}]
  %s6 = sld [smem:[#allocation0]]
  $region69: #{tpu_custom_call.1} parent=0
    _
  %s8 = ssub.s32 1, %s6
  %s9 = scalar_select 0, %s8, %s6
  $region1: #{tpu_custom_call.1} parent=0
    #allocation2 [shape = 'u8[131072]{0}', space=vmem, size = 0x20000, scoped, tag = 'input window, operand 0']
    #allocation3 [shape = 's32[2]{0}', space=sflag, size = 0x8, scoped, tag = 'scoped memory for tpu_custom_call.1']
    #allocation4 [shape = 's32[2]{0}', space=sflag, size = 0x8, scoped, tag = 'scoped memory for tpu_custom_call.1']
    #allocation5 [shape = 'u8[65536]{0}', space=vmem, size = 0x10000, scoped, tag = 'input window, operand 1, single buffered']
    #allocation6 [shape = 's32[1]{0}', space=sflag, size = 0x4, scoped, tag = 'scoped memory for tpu_custom_call.1']
    #allocation7 [shape = 'u8[65536]{0}', space=vmem, size = 0x10000, scoped, tag = 'input window, operand 3, single buffered']
    #allocation8 [shape = 'u8[4096]{0}', space=vmem, size = 0x1000, scoped, tag = 'input window, operand 4, single buffered']
    #allocation9 [shape = 's32[1]{0}', space=sflag, size = 0x4, scoped, tag = 'scoped memory for tpu_custom_call.1']
    #allocation10 [shape = 'u8[131072]{0}', space=vmem, size = 0x20000, scoped, tag = 'output window, operand 0']
    %10 = vsyncpa [#allocation3], 0
    %s11 = scalar_lea.sflag [#allocation3], 1
    %12 = vsyncpa %s11, 0
    %13 = vsyncpa [#allocation6], 0
    %14 = vsyncpa [#allocation9], 0
    %15 = vsyncpa [#allocation4], 0
    %s16 = scalar_lea.sflag [#allocation4], 1
    %17 = vsyncpa %s16, 0
    loop: start=0, step=1, limit=5
    $region2: #{tpu_custom_call.1} parent=1 // loop_pre_header
      _
    $region3: #{tpu_custom_call.1} parent=1 // loop_header
      %s19 = sphi 0, %s23
      %p20 = scmp.ge.s32.totalorder %s19, 5
      %s29 = sphi 0, %s31
      %s32 = sphi 0, %s29
      %s33 = sphi 0, %s32
      %s49 = sphi 0, %s33
      %s53 = sphi 0, %s53
      %s55 = sphi 0, %s53
      %s56 = sphi 0, %s55
      %s70 = sphi 0, %s56
      %s74 = sphi 0, %s74
      %s76 = sphi 0, %s74
      %s77 = sphi 0, %s76
      %s91 = sphi 0, %s77
      %s95 = sphi 0, %s95
      %s97 = sphi 0, %s95
      %s98 = sphi 0, %s97
      %s112 = sphi 0, %s98
      %s116 = sphi 0, %s116
      %s118 = sphi 0, %s116
      %s119 = sphi 0, %s118
      %s133 = sphi 0, %s119
      %s139 = sphi 0, %s141
      %s142 = sphi 0, %s139
      %s143 = sphi 0, %s142
      %s159 = sphi 0, %s143
    $region4: #{tpu_custom_call.1} parent=1 // loop_header_branch
      %22 = sbr.rel (%p20) target = $region8
    $region5: #{tpu_custom_call.1} parent=1 // loop_body
      %s24 = ssub.s32 %s19, 1
      %s25 = ssub.s32 %s19, 2
      %s26 = sadd.s32 %s19, 1
      %s27 = ssub.s32 %s19, %s26
      %p28 = scmp.eq.s32.totalorder %s27, 0
      %s30 = sadd.s32 %s29, 1
      %s31 = scalar_select %p28, %s29, %s30
      %p34 = pneg %p28
      %p35 = scmp.eq.s32.totalorder %s19, 2
      %p36 = por %p34, %p35
      %p37 = scmp.ne.s32.totalorder %s29, %s32
      %p38 = scmp.eq.s32.totalorder %s19, 0
      %p39 = por %p37, %p38
      %p40 = scmp.ne.s32.totalorder %s29, %s32
      %p41 = scmp.eq.s32.totalorder %s24, 2
      %p42 = por %p40, %p41
      %p43 = scmp.ne.s32.totalorder %s32, %s33
      %p44 = scmp.eq.s32.totalorder %s24, 0
      %p45 = por %p43, %p44
      %p46 = scmp.ne.s32.totalorder %s32, %s33
      %p47 = scmp.eq.s32.totalorder %s25, 2
      %p48 = por %p46, %p47
      %p50 = scmp.ne.s32.totalorder %s33, %s49
      %p51 = scmp.eq.s32.totalorder %s25, 0
      %p52 = por %p50, %p51
      %s54 = sadd.s32 %s53, 1
      %p57 = scmp.eq.s32.totalorder %s19, 2
      %p58 = scmp.ne.s32.totalorder %s53, %s55
      %p59 = scmp.eq.s32.totalorder %s19, 0
      %p60 = por %p58, %p59
      %p61 = scmp.ne.s32.totalorder %s53, %s55
      %p62 = scmp.eq.s32.totalorder %s24, 2
      %p63 = por %p61, %p62
      %p64 = scmp.ne.s32.totalorder %s55, %s56
      %p65 = scmp.eq.s32.totalorder %s24, 0
      %p66 = por %p64, %p65
      %p67 = scmp.ne.s32.totalorder %s55, %s56
      %p68 = scmp.eq.s32.totalorder %s25, 2
      %p69 = por %p67, %p68
      %p71 = scmp.ne.s32.totalorder %s56, %s70
      %p72 = scmp.eq.s32.totalorder %s25, 0
      %p73 = por %p71, %p72
      %s75 = sadd.s32 %s74, 1
      %p78 = scmp.eq.s32.totalorder %s19, 2
      %p79 = scmp.ne.s32.totalorder %s74, %s76
      %p80 = scmp.eq.s32.totalorder %s19, 0
      %p81 = por %p79, %p80
      %p82 = scmp.ne.s32.totalorder %s74, %s76
      %p83 = scmp.eq.s32.totalorder %s24, 2
      %p84 = por %p82, %p83
      %p85 = scmp.ne.s32.totalorder %s76, %s77
      %p86 = scmp.eq.s32.totalorder %s24, 0
      %p87 = por %p85, %p86
      %p88 = scmp.ne.s32.totalorder %s76, %s77
      %p89 = scmp.eq.s32.totalorder %s25, 2
      %p90 = por %p88, %p89
      %p92 = scmp.ne.s32.totalorder %s77, %s91
      %p93 = scmp.eq.s32.totalorder %s25, 0
      %p94 = por %p92, %p93
      %s96 = sadd.s32 %s95, 1
      %p99 = scmp.eq.s32.totalorder %s19, 2
      %p100 = scmp.ne.s32.totalorder %s95, %s97
      %p101 = scmp.eq.s32.totalorder %s19, 0
      %p102 = por %p100, %p101
      %p103 = scmp.ne.s32.totalorder %s95, %s97
      %p104 = scmp.eq.s32.totalorder %s24, 2
      %p105 = por %p103, %p104
      %p106 = scmp.ne.s32.totalorder %s97, %s98
      %p107 = scmp.eq.s32.totalorder %s24, 0
      %p108 = por %p106, %p107
      %p109 = scmp.ne.s32.totalorder %s97, %s98
      %p110 = scmp.eq.s32.totalorder %s25, 2
      %p111 = por %p109, %p110
      %p113 = scmp.ne.s32.totalorder %s98, %s112
      %p114 = scmp.eq.s32.totalorder %s25, 0
      %p115 = por %p113, %p114
      %s117 = sadd.s32 %s116, 1
      %p120 = scmp.eq.s32.totalorder %s19, 2
      %p121 = scmp.ne.s32.totalorder %s116, %s118
      %p122 = scmp.eq.s32.totalorder %s19, 0
      %p123 = por %p121, %p122
      %p124 = scmp.ne.s32.totalorder %s116, %s118
      %p125 = scmp.eq.s32.totalorder %s24, 2
      %p126 = por %p124, %p125
      %p127 = scmp.ne.s32.totalorder %s118, %s119
      %p128 = scmp.eq.s32.totalorder %s24, 0
      %p129 = por %p127, %p128
      %p130 = scmp.ne.s32.totalorder %s118, %s119
      %p131 = scmp.eq.s32.totalorder %s25, 2
      %p132 = por %p130, %p131
      %p134 = scmp.ne.s32.totalorder %s119, %s133
      %p135 = scmp.eq.s32.totalorder %s25, 0
      %p136 = por %p134, %p135
      %s137 = ssub.s32 %s19, %s26
      %p138 = scmp.eq.s32.totalorder %s137, 0
      %s140 = sadd.s32 %s139, 1
      %s141 = scalar_select %p138, %s139, %s140
      %p144 = pneg %p138
      %p145 = scmp.eq.s32.totalorder %s19, 2
      %p146 = por %p144, %p145
      %p147 = scmp.ne.s32.totalorder %s139, %s142
      %p148 = scmp.eq.s32.totalorder %s19, 0
      %p149 = por %p147, %p148
      %p150 = scmp.ne.s32.totalorder %s139, %s142
      %p151 = scmp.eq.s32.totalorder %s24, 2
      %p152 = por %p150, %p151
      %p153 = scmp.ne.s32.totalorder %s142, %s143
      %p154 = scmp.eq.s32.totalorder %s24, 0
      %p155 = por %p153, %p154
      %p156 = scmp.ne.s32.totalorder %s142, %s143
      %p157 = scmp.eq.s32.totalorder %s25, 2
      %p158 = por %p156, %p157
      %p160 = scmp.ne.s32.totalorder %s143, %s159
      %p161 = scmp.eq.s32.totalorder %s25, 0
      %p162 = por %p160, %p161
      %p163 = scmp.le.s32.totalorder 1, %s19
      %p164 = scmp.lt.s32.totalorder %s19, 4
      %p165 = pnand %p163, %p164
      %p166 = pneg %p165
      // Predicated region
      $region9: #{tpu_custom_call.1} parent=5 // pred_check
        _
      $region10: #{tpu_custom_call.1} parent=5 // pred_check_branch
        %168 = sbr.rel (%p165) target = $region12
      $region11: #{tpu_custom_call.1} parent=5 // pred_region
        %s169 = ssub.s32 %s19, 1
        // Predicated region
        $region13: #{tpu_custom_call.1} parent=11 // pred_check
          %p170 = pneg %p66
        $region14: #{tpu_custom_call.1} parent=11 // pred_check_branch
          %172 = sbr.rel (%p170) target = $region16
        $region15: #{tpu_custom_call.1} parent=11 // pred_region
          %s174 = ssub.s32 2048, 2048
          %175 = vsyncadd [#allocation6], %s174
          %s176 = sshll.u32 [#allocation5], 4
          %s177 = int_to_ptr.vmem [resolvable:$true] %s176
          %182 = dma.hbm_to_vmem [thread:$0]  %s1, 2048, %s177, [#allocation6], 1024, 1024, 64
        $region16: #{tpu_custom_call.1} parent=11 // pred_fallthru
          _
        // Predicated region
        $region17: #{tpu_custom_call.1} parent=11 // pred_check
          %p183 = pneg %p87
        $region18: #{tpu_custom_call.1} parent=11 // pred_check_branch
          %185 = sbr.rel (%p183) target = $region20
        $region19: #{tpu_custom_call.1} parent=11 // pred_region
          _
        $region20: #{tpu_custom_call.1} parent=11 // pred_fallthru
          _
        // Predicated region
        $region21: #{tpu_custom_call.1} parent=11 // pred_check
          %p186 = pneg %p108
        $region22: #{tpu_custom_call.1} parent=11 // pred_check_branch
          %188 = sbr.rel (%p186) target = $region24
        $region23: #{tpu_custom_call.1} parent=11 // pred_region
          %s190 = ssub.s32 2048, 2048
          %191 = vsyncadd [#allocation6], %s190
          %s192 = sshll.u32 [#allocation7], 4
          %s193 = int_to_ptr.vmem [resolvable:$true] %s192
          %198 = dma.hbm_to_vmem [thread:$0]  %s3, 2048, %s193, [#allocation6], 1024, 1024, 64
        $region24: #{tpu_custom_call.1} parent=11 // pred_fallthru
          _
        // Predicated region
        $region25: #{tpu_custom_call.1} parent=11 // pred_check
          %p199 = pneg %p129
        $region26: #{tpu_custom_call.1} parent=11 // pred_check_branch
          %201 = sbr.rel (%p199) target = $region28
        $region27: #{tpu_custom_call.1} parent=11 // pred_region
          %s203 = ssub.s32 128, 128
          %204 = vsyncadd [#allocation9], %s203
          %s206 = sshll.u32 [#allocation8], 4
          %s207 = int_to_ptr.vmem [resolvable:$true] %s206
          %209 = dma.hbm_to_vmem [thread:$0]  %s4, 128, %s207, [#allocation9]
        $region28: #{tpu_custom_call.1} parent=11 // pred_fallthru
          _
      $region12: #{tpu_custom_call.1} parent=5 // pred_fallthru
        _
      %p210 = scmp.lt.s32.totalorder %s19, 3
      // Predicated region
      $region29: #{tpu_custom_call.1} parent=5 // pred_check
        %p211 = pneg %p210
      $region30: #{tpu_custom_call.1} parent=5 // pred_check_branch
        %213 = sbr.rel (%p211) target = $region32
      $region31: #{tpu_custom_call.1} parent=5 // pred_region
        // Predicated region
        $region33: #{tpu_custom_call.1} parent=31 // pred_check
          %p214 = pneg %p39
        $region34: #{tpu_custom_call.1} parent=31 // pred_check_branch
          %216 = sbr.rel (%p214) target = $region36
        $region35: #{tpu_custom_call.1} parent=31 // pred_region
          %s217 = sand.u32 %s29, 1
          %s218 = scalar_lea.sflag [#allocation3], %s217
          %s219 = sand.u32 %s29, 1
          %s220 = smul.addr %s219, 128
          %s221 = scalar_lea.vmem [#allocation2], %s220
          %s222 = smul.u32 2, %s19
          %s224 = ssub.s32 2048, 2048
          %225 = vsyncadd %s218, %s224
          %s226 = smul.addr %s222, 8
          %s227 = smul.addr %s226, 128
          %s228 = scalar_lea.hbm %s0, %s227
          %s229 = sshll.u32 %s221, 4
          %s230 = int_to_ptr.vmem [resolvable:$true] %s229
          %235 = dma.hbm_to_vmem [thread:$0]  %s228, 2048, %s230, %s218, 1024, 1024, 64
        $region36: #{tpu_custom_call.1} parent=31 // pred_fallthru
          _
      $region32: #{tpu_custom_call.1} parent=5 // pred_fallthru
        _
      %p236 = scmp.le.s32.totalorder 1, %s19
      %p237 = scmp.lt.s32.totalorder %s19, 4
      %p238 = pnand %p236, %p237
      %p239 = pneg %p238
      // Predicated region
      $region37: #{tpu_custom_call.1} parent=5 // pred_check
        _
      $region38: #{tpu_custom_call.1} parent=5 // pred_check_branch
        %241 = sbr.rel (%p238) target = $region40
      $region39: #{tpu_custom_call.1} parent=5 // pred_region
        %s242 = ssub.s32 %s19, 1
        %s243 = sand.u32 %s32, 1
        %s244 = scalar_lea.sflag [#allocation3], %s243
        %s245 = sand.u32 %s32, 1
        %s246 = smul.addr %s245, 128
        %s247 = scalar_lea.vmem [#allocation2], %s246
        // Predicated region
        $region41: #{tpu_custom_call.1} parent=39 // pred_check
          %p248 = pneg %p45
        $region42: #{tpu_custom_call.1} parent=39 // pred_check_branch
          %250 = sbr.rel (%p248) target = $region44
        $region43: #{tpu_custom_call.1} parent=39 // pred_region
          %251 = dma.done %s244, 2048
        $region44: #{tpu_custom_call.1} parent=39 // pred_fallthru
          _
        // Predicated region
        $region45: #{tpu_custom_call.1} parent=39 // pred_check
          %p252 = pneg %p66
        $region46: #{tpu_custom_call.1} parent=39 // pred_check_branch
          %254 = sbr.rel (%p252) target = $region48
        $region47: #{tpu_custom_call.1} parent=39 // pred_region
          %255 = dma.done [#allocation6], 2048
        $region48: #{tpu_custom_call.1} parent=39 // pred_fallthru
          _
        // Predicated region
        $region49: #{tpu_custom_call.1} parent=39 // pred_check
          %p256 = pneg %p108
        $region50: #{tpu_custom_call.1} parent=39 // pred_check_branch
          %258 = sbr.rel (%p256) target = $region52
        $region51: #{tpu_custom_call.1} parent=39 // pred_region
          %259 = dma.done [#allocation6], 2048
        $region52: #{tpu_custom_call.1} parent=39 // pred_fallthru
          _
        // Predicated region
        $region53: #{tpu_custom_call.1} parent=39 // pred_check
          %p260 = pneg %p129
        $region54: #{tpu_custom_call.1} parent=39 // pred_check_branch
          %262 = sbr.rel (%p260) target = $region56
        $region55: #{tpu_custom_call.1} parent=39 // pred_region
          %263 = dma.done [#allocation9], 128
        $region56: #{tpu_custom_call.1} parent=39 // pred_fallthru
          _
        %s264 = sand.u32 %s32, 1
        %s265 = scalar_lea.sflag [#allocation3], %s264
        %s266 = sand.u32 %s32, 1
        %s267 = smul.addr %s266, 128
        %s268 = scalar_lea.vmem [#allocation2], %s267
        %p269 = pneg %p45
        %p270 = pneg %p42
        %p271 = pneg %p66
        %p272 = pneg %p63
        %p273 = pneg %p87
        %p274 = pneg %p84
        %p275 = pneg %p108
        %p276 = pneg %p105
        %p277 = pneg %p129
        %p278 = pneg %p126
        %p279 = pneg %p155
        %p280 = pneg %p152
        %s281 = sand.u32 %s142, 1
        %s282 = scalar_lea.sflag [#allocation4], %s281
        %s283 = sand.u32 %s142, 1
        %s284 = smul.addr %s283, 128
        %s285 = scalar_lea.vmem [#allocation10], %s284
        %s286 = smul.u32 2, %s24
        %s287 = smul.u32 2, %s24
        %v288 = vld [vmem:[%s247] sm:$0xff]
        %v289 = vld [vmem:[%s247 + $0x8] sm:$0xff]
        %v290 = vld [vmem:[%s247 + $0x10] sm:$0xff]
        %v291 = vld [vmem:[%s247 + $0x18] sm:$0xff]
        %v292 = vld [vmem:[%s247 + $0x20] sm:$0xff]
        %v293 = vld [vmem:[%s247 + $0x28] sm:$0xff]
        %v294 = vld [vmem:[%s247 + $0x30] sm:$0xff]
        %v295 = vld [vmem:[%s247 + $0x38] sm:$0xff]
        %v296 = vld [vmem:[%s247 + $0x40] sm:$0xff]
        %v297 = vld [vmem:[%s247 + $0x48] sm:$0xff]
        %v298 = vld [vmem:[%s247 + $0x50] sm:$0xff]
        %v299 = vld [vmem:[%s247 + $0x58] sm:$0xff]
        %v300 = vld [vmem:[%s247 + $0x60] sm:$0xff]
        %v301 = vld [vmem:[%s247 + $0x68] sm:$0xff]
        %v302 = vld [vmem:[%s247 + $0x70] sm:$0xff]
        %v303 = vld [vmem:[%s247 + $0x78] sm:$0xff]
        %v304 = vld [vmem:[#allocation5] sm:$0xff]
        %v305 = vld [vmem:[#allocation5 + $0x8] sm:$0xff]
        %v306 = vld [vmem:[#allocation5 + $0x10] sm:$0xff]
        %v307 = vld [vmem:[#allocation5 + $0x18] sm:$0xff]
        %v308 = vld [vmem:[#allocation5 + $0x20] sm:$0xff]
        %v309 = vld [vmem:[#allocation5 + $0x28] sm:$0xff]
        %v310 = vld [vmem:[#allocation5 + $0x30] sm:$0xff]
        %v311 = vld [vmem:[#allocation5 + $0x38] sm:$0xff]
        %v312 = vld [vmem:[#allocation5 + $0x40] sm:$0x3]
        %v313 = vld [vmem:[#allocation5 + $0x48] sm:$0x3]
        %v314 = vld [vmem:[#allocation5 + $0x50] sm:$0x3]
        %v315 = vld [vmem:[#allocation5 + $0x58] sm:$0x3]
        %v316 = vld [vmem:[#allocation5 + $0x60] sm:$0x3]
        %v317 = vld [vmem:[#allocation5 + $0x68] sm:$0x3]
        %v318 = vld [vmem:[#allocation5 + $0x70] sm:$0x3]
        %v319 = vld [vmem:[#allocation5 + $0x78] sm:$0x3]
        %v320 = vld [vmem:[%s2] sm:$0x1]
        %v322 = vlaneseq
        %v323 = vshrl.u32 %v322, 7
        %v324 = vsub.s32 0, %v323
        %v325 = vrot.slane %v320, %v324
        %327 = vmatprep.subr.mxu0 0.0
        %328 = vmatpush1.xpose.msra.mxu0 0.0
        %329 = vmatprep.subr.mxu0 0.0
        %330 = vmatpush1.xpose.msra.mxu0 0.0
        %331 = vmatprep.subr.mxu0 0.0
        %332 = vmatpush1.xpose.msra.mxu0 0.0
        %333 = vmatprep.subr.mxu0 0.0
        %334 = vmatpush1.xpose.msra.mxu0 0.0
        %335 = vmatprep.subr.mxu0 0.0
        %336 = vmatpush1.xpose.msra.mxu0 0.0
        %337 = vmatprep.subr.mxu0 0.0
        %338 = vmatpush1.xpose.msra.mxu0 0.0
        %339 = vmatprep.subr.mxu0 0.0
        %340 = vmatpush1.xpose.msra.mxu0 0.0
        %341 = vmatprep.subr.mxu0 0.0
        %342 = vmatpush1.xpose.msra.mxu0 0.0
        %343 = vmatprep.subr.mxu0 0.0
        %344 = vmatpush1.xpose.msra.mxu0 0.0
        %345 = vmatprep.subr.mxu0 0.0
        %346 = vmatpush1.xpose.msra.mxu0 0.0
        %347 = vmatprep.subr.mxu0 0.0
        %348 = vmatpush1.xpose.msra.mxu0 0.0
        %349 = vmatprep.subr.mxu0 0.0
        %350 = vmatpush1.xpose.msra.mxu0 0.0
        %351 = vmatprep.subr.mxu0 0.0
        %352 = vmatpush1.xpose.msra.mxu0 0.0
        %353 = vmatprep.subr.mxu0 0.0
        %354 = vmatpush1.xpose.msra.mxu0 0.0
        %355 = vmatprep.subr.mxu0 %v313
        %356 = vmatpush1.xpose.msra.mxu0 %v312
        %357 = vmatprep.subr.mxu0 %v305
        %358 = vmatpush1.xpose.msra.mxu0 %v304
        %359 = vmatprep.subr.mxu0 0.0
        %360 = vmatpush2.xpose.msra.mxu0 0.0
        %361 = vmatprep.subr.mxu0 0.0
        %362 = vmatpush2.xpose.msra.mxu0 0.0
        %363 = vmatprep.subr.mxu0 0.0
        %364 = vmatpush2.xpose.msra.mxu0 0.0
        %365 = vmatprep.subr.mxu0 0.0
        %366 = vmatpush2.xpose.msra.mxu0 0.0
        %367 = vmatprep.subr.mxu0 0.0
        %368 = vmatpush2.xpose.msra.mxu0 0.0
        %369 = vmatprep.subr.mxu0 0.0
        %370 = vmatpush2.xpose.msra.mxu0 0.0
        %371 = vmatprep.subr.mxu0 0.0
        %372 = vmatpush2.xpose.msra.mxu0 0.0
        %373 = vmatprep.subr.mxu0 0.0
        %374 = vmatpush2.xpose.msra.mxu0 0.0
        %375 = vmatprep.subr.mxu0 0.0
        %376 = vmatpush2.xpose.msra.mxu0 0.0
        %377 = vmatprep.subr.mxu0 0.0
        %378 = vmatpush2.xpose.msra.mxu0 0.0
        %379 = vmatprep.subr.mxu0 0.0
        %380 = vmatpush2.xpose.msra.mxu0 0.0
        %381 = vmatprep.subr.mxu0 0.0
        %382 = vmatpush2.xpose.msra.mxu0 0.0
        %383 = vmatprep.subr.mxu0 0.0
        %384 = vmatpush2.xpose.msra.mxu0 0.0
        %385 = vmatprep.subr.mxu0 0.0
        %386 = vmatpush2.xpose.msra.mxu0 0.0
        %387 = vmatprep.subr.mxu0 0.0
        %388 = vmatpush2.xpose.msra.mxu0 0.0
        %389 = vmatprep.subr.mxu0 0.0
        %390 = vmatpush2.xpose.msra.mxu0 0.0
        %391 = vmatprep.mubr.f32.mxu0 %v289
        %392 = vmatmul.mubr.f32.gmra.mxu0 %v288
        %v393 = vpop.f32.mrf.mxu0
        %v394 = vadd.f32 %v325, %v393
        %v395 = vpop.f32.mrf.mxu0
        %396 = vmatprep.mubr.f32.mxu0 %v297
        %397 = vmatmul.mubr.f32.gmra.mxu0 %v296
        %v398 = vpop.f32.mrf.mxu0
        %v399 = vadd.f32 %v325, %v398
        %v400 = vpop.f32.mrf.mxu0
        %401 = vdwg.mxu0
        %402 = vmatprep.subr.mxu0 0.0
        %403 = vmatpush1.xpose.msra.mxu0 0.0
        %404 = vmatprep.subr.mxu0 0.0
        %405 = vmatpush1.xpose.msra.mxu0 0.0
        %406 = vmatprep.subr.mxu0 0.0
        %407 = vmatpush1.xpose.msra.mxu0 0.0
        %408 = vmatprep.subr.mxu0 0.0
        %409 = vmatpush1.xpose.msra.mxu0 0.0
        %410 = vmatprep.subr.mxu0 0.0
        %411 = vmatpush1.xpose.msra.mxu0 0.0
        %412 = vmatprep.subr.mxu0 0.0
        %413 = vmatpush1.xpose.msra.mxu0 0.0
        %414 = vmatprep.subr.mxu0 0.0
        %415 = vmatpush1.xpose.msra.mxu0 0.0
        %416 = vmatprep.subr.mxu0 0.0
        %417 = vmatpush1.xpose.msra.mxu0 0.0
        %418 = vmatprep.subr.mxu0 0.0
        %419 = vmatpush1.xpose.msra.mxu0 0.0
        %420 = vmatprep.subr.mxu0 0.0
        %421 = vmatpush1.xpose.msra.mxu0 0.0
        %422 = vmatprep.subr.mxu0 0.0
        %423 = vmatpush1.xpose.msra.mxu0 0.0
        %424 = vmatprep.subr.mxu0 0.0
        %425 = vmatpush1.xpose.msra.mxu0 0.0
        %426 = vmatprep.subr.mxu0 0.0
        %427 = vmatpush1.xpose.msra.mxu0 0.0
        %428 = vmatprep.subr.mxu0 0.0
        %429 = vmatpush1.xpose.msra.mxu0 0.0
        %430 = vmatprep.subr.mxu0 %v315
        %431 = vmatpush1.xpose.msra.mxu0 %v314
        %432 = vmatprep.subr.mxu0 %v307
        %433 = vmatpush1.xpose.msra.mxu0 %v306
        %434 = vmatprep.subr.mxu0 0.0
        %435 = vmatpush2.xpose.msra.mxu0 0.0
        %436 = vmatprep.subr.mxu0 0.0
        %437 = vmatpush2.xpose.msra.mxu0 0.0
        %438 = vmatprep.subr.mxu0 0.0
        %439 = vmatpush2.xpose.msra.mxu0 0.0
        %440 = vmatprep.subr.mxu0 0.0
        %441 = vmatpush2.xpose.msra.mxu0 0.0
        %442 = vmatprep.subr.mxu0 0.0
        %443 = vmatpush2.xpose.msra.mxu0 0.0
        %444 = vmatprep.subr.mxu0 0.0
        %445 = vmatpush2.xpose.msra.mxu0 0.0
        %446 = vmatprep.subr.mxu0 0.0
        %447 = vmatpush2.xpose.msra.mxu0 0.0
        %448 = vmatprep.subr.mxu0 0.0
        %449 = vmatpush2.xpose.msra.mxu0 0.0
        %450 = vmatprep.subr.mxu0 0.0
        %451 = vmatpush2.xpose.msra.mxu0 0.0
        %452 = vmatprep.subr.mxu0 0.0
        %453 = vmatpush2.xpose.msra.mxu0 0.0
        %454 = vmatprep.subr.mxu0 0.0
        %455 = vmatpush2.xpose.msra.mxu0 0.0
        %456 = vmatprep.subr.mxu0 0.0
        %457 = vmatpush2.xpose.msra.mxu0 0.0
        %458 = vmatprep.subr.mxu0 0.0
        %459 = vmatpush2.xpose.msra.mxu0 0.0
        %460 = vmatprep.subr.mxu0 0.0
        %461 = vmatpush2.xpose.msra.mxu0 0.0
        %462 = vmatprep.subr.mxu0 0.0
        %463 = vmatpush2.xpose.msra.mxu0 0.0
        %464 = vmatprep.subr.mxu0 0.0
        %465 = vmatpush2.xpose.msra.mxu0 0.0
        %466 = vmatprep.mubr.f32.mxu0 %v291
        %467 = vmatmul.mubr.f32.gmra.mxu0 %v290
        %v468 = vpop.f32.mrf.mxu0
        %v469 = vadd.f32 %v394, %v468
        %v470 = vpop.f32.mrf.mxu0
        %471 = vmatprep.mubr.f32.mxu0 %v299
        %472 = vmatmul.mubr.f32.gmra.mxu0 %v298
        %v473 = vpop.f32.mrf.mxu0
        %v474 = vadd.f32 %v399, %v473
        %v475 = vpop.f32.mrf.mxu0
        %476 = vdwg.mxu0
        %477 = vmatprep.subr.mxu0 0.0
        %478 = vmatpush1.xpose.msra.mxu0 0.0
        %479 = vmatprep.subr.mxu0 0.0
        %480 = vmatpush1.xpose.msra.mxu0 0.0
        %481 = vmatprep.subr.mxu0 0.0
        %482 = vmatpush1.xpose.msra.mxu0 0.0
        %483 = vmatprep.subr.mxu0 0.0
        %484 = vmatpush1.xpose.msra.mxu0 0.0
        %485 = vmatprep.subr.mxu0 0.0
        %486 = vmatpush1.xpose.msra.mxu0 0.0
        %487 = vmatprep.subr.mxu0 0.0
        %488 = vmatpush1.xpose.msra.mxu0 0.0
        %489 = vmatprep.subr.mxu0 0.0
        %490 = vmatpush1.xpose.msra.mxu0 0.0
        %491 = vmatprep.subr.mxu0 0.0
        %492 = vmatpush1.xpose.msra.mxu0 0.0
        %493 = vmatprep.subr.mxu0 0.0
        %494 = vmatpush1.xpose.msra.mxu0 0.0
        %495 = vmatprep.subr.mxu0 0.0
        %496 = vmatpush1.xpose.msra.mxu0 0.0
        %497 = vmatprep.subr.mxu0 0.0
        %498 = vmatpush1.xpose.msra.mxu0 0.0
        %499 = vmatprep.subr.mxu0 0.0
        %500 = vmatpush1.xpose.msra.mxu0 0.0
        %501 = vmatprep.subr.mxu0 0.0
        %502 = vmatpush1.xpose.msra.mxu0 0.0
        %503 = vmatprep.subr.mxu0 0.0
        %504 = vmatpush1.xpose.msra.mxu0 0.0
        %505 = vmatprep.subr.mxu0 %v317
        %506 = vmatpush1.xpose.msra.mxu0 %v316
        %507 = vmatprep.subr.mxu0 %v309
        %508 = vmatpush1.xpose.msra.mxu0 %v308
        %509 = vmatprep.subr.mxu0 0.0
        %510 = vmatpush2.xpose.msra.mxu0 0.0
        %511 = vmatprep.subr.mxu0 0.0
        %512 = vmatpush2.xpose.msra.mxu0 0.0
        %513 = vmatprep.subr.mxu0 0.0
        %514 = vmatpush2.xpose.msra.mxu0 0.0
        %515 = vmatprep.subr.mxu0 0.0
        %516 = vmatpush2.xpose.msra.mxu0 0.0
        %517 = vmatprep.subr.mxu0 0.0
        %518 = vmatpush2.xpose.msra.mxu0 0.0
        %519 = vmatprep.subr.mxu0 0.0
        %520 = vmatpush2.xpose.msra.mxu0 0.0
        %521 = vmatprep.subr.mxu0 0.0
        %522 = vmatpush2.xpose.msra.mxu0 0.0
        %523 = vmatprep.subr.mxu0 0.0
        %524 = vmatpush2.xpose.msra.mxu0 0.0
        %525 = vmatprep.subr.mxu0 0.0
        %526 = vmatpush2.xpose.msra.mxu0 0.0
        %527 = vmatprep.subr.mxu0 0.0
        %528 = vmatpush2.xpose.msra.mxu0 0.0
        %529 = vmatprep.subr.mxu0 0.0
        %530 = vmatpush2.xpose.msra.mxu0 0.0
        %531 = vmatprep.subr.mxu0 0.0
        %532 = vmatpush2.xpose.msra.mxu0 0.0
        %533 = vmatprep.subr.mxu0 0.0
        %534 = vmatpush2.xpose.msra.mxu0 0.0
        %535 = vmatprep.subr.mxu0 0.0
        %536 = vmatpush2.xpose.msra.mxu0 0.0
        %537 = vmatprep.subr.mxu0 0.0
        %538 = vmatpush2.xpose.msra.mxu0 0.0
        %539 = vmatprep.subr.mxu0 0.0
        %540 = vmatpush2.xpose.msra.mxu0 0.0
        %541 = vmatprep.mubr.f32.mxu0 %v293
        %542 = vmatmul.mubr.f32.gmra.mxu0 %v292
        %v543 = vpop.f32.mrf.mxu0
        %v544 = vadd.f32 %v469, %v543
        %v545 = vpop.f32.mrf.mxu0
        %546 = vmatprep.mubr.f32.mxu0 %v301
        %547 = vmatmul.mubr.f32.gmra.mxu0 %v300
        %v548 = vpop.f32.mrf.mxu0
        %v549 = vadd.f32 %v474, %v548
        %v550 = vpop.f32.mrf.mxu0
        %551 = vdwg.mxu0
        %552 = vmatprep.subr.mxu0 0.0
        %553 = vmatpush1.xpose.msra.mxu0 0.0
        %554 = vmatprep.subr.mxu0 0.0
        %555 = vmatpush1.xpose.msra.mxu0 0.0
        %556 = vmatprep.subr.mxu0 0.0
        %557 = vmatpush1.xpose.msra.mxu0 0.0
        %558 = vmatprep.subr.mxu0 0.0
        %559 = vmatpush1.xpose.msra.mxu0 0.0
        %560 = vmatprep.subr.mxu0 0.0
        %561 = vmatpush1.xpose.msra.mxu0 0.0
        %562 = vmatprep.subr.mxu0 0.0
        %563 = vmatpush1.xpose.msra.mxu0 0.0
        %564 = vmatprep.subr.mxu0 0.0
        %565 = vmatpush1.xpose.msra.mxu0 0.0
        %566 = vmatprep.subr.mxu0 0.0
        %567 = vmatpush1.xpose.msra.mxu0 0.0
        %568 = vmatprep.subr.mxu0 0.0
        %569 = vmatpush1.xpose.msra.mxu0 0.0
        %570 = vmatprep.subr.mxu0 0.0
        %571 = vmatpush1.xpose.msra.mxu0 0.0
        %572 = vmatprep.subr.mxu0 0.0
        %573 = vmatpush1.xpose.msra.mxu0 0.0
        %574 = vmatprep.subr.mxu0 0.0
        %575 = vmatpush1.xpose.msra.mxu0 0.0
        %576 = vmatprep.subr.mxu0 0.0
        %577 = vmatpush1.xpose.msra.mxu0 0.0
        %578 = vmatprep.subr.mxu0 0.0
        %579 = vmatpush1.xpose.msra.mxu0 0.0
        %580 = vmatprep.subr.mxu0 %v319
        %581 = vmatpush1.xpose.msra.mxu0 %v318
        %582 = vmatprep.subr.mxu0 %v311
        %583 = vmatpush1.xpose.msra.mxu0 %v310
        %584 = vmatprep.subr.mxu0 0.0
        %585 = vmatpush2.xpose.msra.mxu0 0.0
        %586 = vmatprep.subr.mxu0 0.0
        %587 = vmatpush2.xpose.msra.mxu0 0.0
        %588 = vmatprep.subr.mxu0 0.0
        %589 = vmatpush2.xpose.msra.mxu0 0.0
        %590 = vmatprep.subr.mxu0 0.0
        %591 = vmatpush2.xpose.msra.mxu0 0.0
        %592 = vmatprep.subr.mxu0 0.0
        %593 = vmatpush2.xpose.msra.mxu0 0.0
        %594 = vmatprep.subr.mxu0 0.0
        %595 = vmatpush2.xpose.msra.mxu0 0.0
        %596 = vmatprep.subr.mxu0 0.0
        %597 = vmatpush2.xpose.msra.mxu0 0.0
        %598 = vmatprep.subr.mxu0 0.0
        %599 = vmatpush2.xpose.msra.mxu0 0.0
        %600 = vmatprep.subr.mxu0 0.0
        %601 = vmatpush2.xpose.msra.mxu0 0.0
        %602 = vmatprep.subr.mxu0 0.0
        %603 = vmatpush2.xpose.msra.mxu0 0.0
        %604 = vmatprep.subr.mxu0 0.0
        %605 = vmatpush2.xpose.msra.mxu0 0.0
        %606 = vmatprep.subr.mxu0 0.0
        %607 = vmatpush2.xpose.msra.mxu0 0.0
        %608 = vmatprep.subr.mxu0 0.0
        %609 = vmatpush2.xpose.msra.mxu0 0.0
        %610 = vmatprep.subr.mxu0 0.0
        %611 = vmatpush2.xpose.msra.mxu0 0.0
        %612 = vmatprep.subr.mxu0 0.0
        %613 = vmatpush2.xpose.msra.mxu0 0.0
        %614 = vmatprep.subr.mxu0 0.0
        %615 = vmatpush2.xpose.msra.mxu0 0.0
        %616 = vmatprep.mubr.f32.mxu0 %v295
        %617 = vmatmul.mubr.f32.gmra.mxu0 %v294
        %v618 = vpop.f32.mrf.mxu0
        %v619 = vadd.f32 %v544, %v618
        %v620 = vpop.f32.mrf.mxu0
        %621 = vmatprep.mubr.f32.mxu0 %v303
        %622 = vmatmul.mubr.f32.gmra.mxu0 %v302
        %v623 = vpop.f32.mrf.mxu0
        %v624 = vadd.f32 %v549, %v623
        %v625 = vpop.f32.mrf.mxu0
        %626 = vdwg.mxu0
        %v627 = vld [vmem:[#allocation7] sm:$0xff]
        %v628 = vld [vmem:[#allocation7 + $0x8] sm:$0xff]
        %v629 = vld [vmem:[#allocation7 + $0x10] sm:$0xff]
        %v630 = vld [vmem:[#allocation7 + $0x18] sm:$0xff]
        %v631 = vld [vmem:[#allocation7 + $0x20] sm:$0xff]
        %v632 = vld [vmem:[#allocation7 + $0x28] sm:$0xff]
        %v633 = vld [vmem:[#allocation7 + $0x30] sm:$0xff]
        %v634 = vld [vmem:[#allocation7 + $0x38] sm:$0xff]
        %v635 = vld [vmem:[#allocation7 + $0x40] sm:$0x3]
        %v636 = vld [vmem:[#allocation7 + $0x48] sm:$0x3]
        %v637 = vld [vmem:[#allocation7 + $0x50] sm:$0x3]
        %v638 = vld [vmem:[#allocation7 + $0x58] sm:$0x3]
        %v639 = vld [vmem:[#allocation7 + $0x60] sm:$0x3]
        %v640 = vld [vmem:[#allocation7 + $0x68] sm:$0x3]
        %v641 = vld [vmem:[#allocation7 + $0x70] sm:$0x3]
        %v642 = vld [vmem:[#allocation7 + $0x78] sm:$0x3]
        %v643 = vld [vmem:[#allocation8] sm:$0xff]
        %v645 = vlaneseq
        %v646 = vshrl.u32 %v645, 7
        %v647 = vsub.s32 0, %v646
        %v648 = vrot.slane %v643, %v647
        %v649 = vlaneseq
        %v650 = vshrl.u32 %v649, 7
        %v651 = vsub.s32 1, %v650
        %v652 = vrot.slane %v643, %v651
        %v653 = vlaneseq
        %v654 = vshrl.u32 %v653, 7
        %v655 = vsub.s32 2, %v654
        %v656 = vrot.slane %v643, %v655
        %v657 = vlaneseq
        %v658 = vshrl.u32 %v657, 7
        %v659 = vsub.s32 3, %v658
        %v660 = vrot.slane %v643, %v659
        %v661 = vlaneseq
        %v662 = vshrl.u32 %v661, 7
        %v663 = vsub.s32 4, %v662
        %v664 = vrot.slane %v643, %v663
        %v665 = vlaneseq
        %v666 = vshrl.u32 %v665, 7
        %v667 = vsub.s32 5, %v666
        %v668 = vrot.slane %v643, %v667
        %v669 = vlaneseq
        %v670 = vshrl.u32 %v669, 7
        %v671 = vsub.s32 6, %v670
        %v672 = vrot.slane %v643, %v671
        %v673 = vlaneseq
        %v674 = vshrl.u32 %v673, 7
        %v675 = vsub.s32 7, %v674
        %v676 = vrot.slane %v643, %v675
        %vm685 = vcmask 80896
        %v687 = vsel %vm685, %v619, 0
        %v690 = vsel %vm685, %v624, 0
        %vm692 = vcmask 1041408
        %v694 = vsel %vm692, %v635, 0
        %v697 = vsel %vm692, %v636, 0
        %v700 = vsel %vm692, %v637, 0
        %v703 = vsel %vm692, %v638, 0
        %v706 = vsel %vm692, %v639, 0
        %v709 = vsel %vm692, %v640, 0
        %v712 = vsel %vm692, %v641, 0
        %v715 = vsel %vm692, %v642, 0
        %717 = vmatprep.subr.mxu0 0.0
        %718 = vmatpush1.msra.mxu0 0.0
        %719 = vmatprep.subr.mxu0 0.0
        %720 = vmatpush1.msra.mxu0 0.0
        %721 = vmatprep.subr.mxu0 0.0
        %722 = vmatpush1.msra.mxu0 0.0
        %723 = vmatprep.subr.mxu0 0.0
        %724 = vmatpush1.msra.mxu0 0.0
        %725 = vmatprep.subr.mxu0 0.0
        %726 = vmatpush1.msra.mxu0 0.0
        %727 = vmatprep.subr.mxu0 0.0
        %728 = vmatpush1.msra.mxu0 0.0
        %729 = vmatprep.subr.mxu0 0.0
        %730 = vmatpush1.msra.mxu0 0.0
        %731 = vmatprep.subr.mxu0 0.0
        %732 = vmatpush1.msra.mxu0 0.0
        %733 = vmatprep.subr.mxu0 0.0
        %734 = vmatpush1.msra.mxu0 0.0
        %735 = vmatprep.subr.mxu0 0.0
        %736 = vmatpush1.msra.mxu0 0.0
        %737 = vmatprep.subr.mxu0 0.0
        %738 = vmatpush1.msra.mxu0 0.0
        %739 = vmatprep.subr.mxu0 0.0
        %740 = vmatpush1.msra.mxu0 0.0
        %741 = vmatprep.subr.mxu0 0.0
        %742 = vmatpush1.msra.mxu0 0.0
        %743 = vmatprep.subr.mxu0 0.0
        %744 = vmatpush1.msra.mxu0 0.0
        %745 = vmatprep.subr.mxu0 %v697
        %746 = vmatpush1.msra.mxu0 %v694
        %747 = vmatprep.subr.mxu0 %v628
        %748 = vmatpush1.msra.mxu0 %v627
        %749 = vmatprep.subr.mxu0 0.0
        %750 = vmatpush2.msra.mxu0 0.0
        %751 = vmatprep.subr.mxu0 0.0
        %752 = vmatpush2.msra.mxu0 0.0
        %753 = vmatprep.subr.mxu0 0.0
        %754 = vmatpush2.msra.mxu0 0.0
        %755 = vmatprep.subr.mxu0 0.0
        %756 = vmatpush2.msra.mxu0 0.0
        %757 = vmatprep.subr.mxu0 0.0
        %758 = vmatpush2.msra.mxu0 0.0
        %759 = vmatprep.subr.mxu0 0.0
        %760 = vmatpush2.msra.mxu0 0.0
        %761 = vmatprep.subr.mxu0 0.0
        %762 = vmatpush2.msra.mxu0 0.0
        %763 = vmatprep.subr.mxu0 0.0
        %764 = vmatpush2.msra.mxu0 0.0
        %765 = vmatprep.subr.mxu0 0.0
        %766 = vmatpush2.msra.mxu0 0.0
        %767 = vmatprep.subr.mxu0 0.0
        %768 = vmatpush2.msra.mxu0 0.0
        %769 = vmatprep.subr.mxu0 0.0
        %770 = vmatpush2.msra.mxu0 0.0
        %771 = vmatprep.subr.mxu0 0.0
        %772 = vmatpush2.msra.mxu0 0.0
        %773 = vmatprep.subr.mxu0 0.0
        %774 = vmatpush2.msra.mxu0 0.0
        %775 = vmatprep.subr.mxu0 0.0
        %776 = vmatpush2.msra.mxu0 0.0
        %777 = vmatprep.subr.mxu0 0.0
        %778 = vmatpush2.msra.mxu0 0.0
        %779 = vmatprep.subr.mxu0 0.0
        %780 = vmatpush2.msra.mxu0 0.0
        %781 = vmatprep.mubr.f32.mxu0 0.0
        %782 = vmatmul.mubr.f32.gmra.mxu0 %v687
        %v783 = vpop.f32.mrf.mxu0
        %v784 = vadd.f32 %v648, %v783
        %v785 = vpop.f32.mrf.mxu0
        %v786 = vadd.f32 %v652, %v785
        %787 = vmatprep.mubr.f32.mxu0 0.0
        %788 = vmatmul.mubr.f32.gmra.mxu0 %v690
        %v789 = vpop.f32.mrf.mxu0
        %v790 = vadd.f32 %v648, %v789
        %v791 = vpop.f32.mrf.mxu0
        %v792 = vadd.f32 %v652, %v791
        %793 = vdwg.mxu0
        %794 = vmatprep.subr.mxu0 0.0
        %795 = vmatpush1.msra.mxu0 0.0
        %796 = vmatprep.subr.mxu0 0.0
        %797 = vmatpush1.msra.mxu0 0.0
        %798 = vmatprep.subr.mxu0 0.0
        %799 = vmatpush1.msra.mxu0 0.0
        %800 = vmatprep.subr.mxu0 0.0
        %801 = vmatpush1.msra.mxu0 0.0
        %802 = vmatprep.subr.mxu0 0.0
        %803 = vmatpush1.msra.mxu0 0.0
        %804 = vmatprep.subr.mxu0 0.0
        %805 = vmatpush1.msra.mxu0 0.0
        %806 = vmatprep.subr.mxu0 0.0
        %807 = vmatpush1.msra.mxu0 0.0
        %808 = vmatprep.subr.mxu0 0.0
        %809 = vmatpush1.msra.mxu0 0.0
        %810 = vmatprep.subr.mxu0 0.0
        %811 = vmatpush1.msra.mxu0 0.0
        %812 = vmatprep.subr.mxu0 0.0
        %813 = vmatpush1.msra.mxu0 0.0
        %814 = vmatprep.subr.mxu0 0.0
        %815 = vmatpush1.msra.mxu0 0.0
        %816 = vmatprep.subr.mxu0 0.0
        %817 = vmatpush1.msra.mxu0 0.0
        %818 = vmatprep.subr.mxu0 0.0
        %819 = vmatpush1.msra.mxu0 0.0
        %820 = vmatprep.subr.mxu0 0.0
        %821 = vmatpush1.msra.mxu0 0.0
        %822 = vmatprep.subr.mxu0 %v703
        %823 = vmatpush1.msra.mxu0 %v700
        %824 = vmatprep.subr.mxu0 %v630
        %825 = vmatpush1.msra.mxu0 %v629
        %826 = vmatprep.subr.mxu0 0.0
        %827 = vmatpush2.msra.mxu0 0.0
        %828 = vmatprep.subr.mxu0 0.0
        %829 = vmatpush2.msra.mxu0 0.0
        %830 = vmatprep.subr.mxu0 0.0
        %831 = vmatpush2.msra.mxu0 0.0
        %832 = vmatprep.subr.mxu0 0.0
        %833 = vmatpush2.msra.mxu0 0.0
        %834 = vmatprep.subr.mxu0 0.0
        %835 = vmatpush2.msra.mxu0 0.0
        %836 = vmatprep.subr.mxu0 0.0
        %837 = vmatpush2.msra.mxu0 0.0
        %838 = vmatprep.subr.mxu0 0.0
        %839 = vmatpush2.msra.mxu0 0.0
        %840 = vmatprep.subr.mxu0 0.0
        %841 = vmatpush2.msra.mxu0 0.0
        %842 = vmatprep.subr.mxu0 0.0
        %843 = vmatpush2.msra.mxu0 0.0
        %844 = vmatprep.subr.mxu0 0.0
        %845 = vmatpush2.msra.mxu0 0.0
        %846 = vmatprep.subr.mxu0 0.0
        %847 = vmatpush2.msra.mxu0 0.0
        %848 = vmatprep.subr.mxu0 0.0
        %849 = vmatpush2.msra.mxu0 0.0
        %850 = vmatprep.subr.mxu0 0.0
        %851 = vmatpush2.msra.mxu0 0.0
        %852 = vmatprep.subr.mxu0 0.0
        %853 = vmatpush2.msra.mxu0 0.0
        %854 = vmatprep.subr.mxu0 0.0
        %855 = vmatpush2.msra.mxu0 0.0
        %856 = vmatprep.subr.mxu0 0.0
        %857 = vmatpush2.msra.mxu0 0.0
        %858 = vmatprep.mubr.f32.mxu0 0.0
        %859 = vmatmul.mubr.f32.gmra.mxu0 %v687
        %v860 = vpop.f32.mrf.mxu0
        %v861 = vadd.f32 %v656, %v860
        %v862 = vpop.f32.mrf.mxu0
        %v863 = vadd.f32 %v660, %v862
        %864 = vmatprep.mubr.f32.mxu0 0.0
        %865 = vmatmul.mubr.f32.gmra.mxu0 %v690
        %v866 = vpop.f32.mrf.mxu0
        %v867 = vadd.f32 %v656, %v866
        %v868 = vpop.f32.mrf.mxu0
        %v869 = vadd.f32 %v660, %v868
        %870 = vdwg.mxu0
        %871 = vmatprep.subr.mxu0 0.0
        %872 = vmatpush1.msra.mxu0 0.0
        %873 = vmatprep.subr.mxu0 0.0
        %874 = vmatpush1.msra.mxu0 0.0
        %875 = vmatprep.subr.mxu0 0.0
        %876 = vmatpush1.msra.mxu0 0.0
        %877 = vmatprep.subr.mxu0 0.0
        %878 = vmatpush1.msra.mxu0 0.0
        %879 = vmatprep.subr.mxu0 0.0
        %880 = vmatpush1.msra.mxu0 0.0
        %881 = vmatprep.subr.mxu0 0.0
        %882 = vmatpush1.msra.mxu0 0.0
        %883 = vmatprep.subr.mxu0 0.0
        %884 = vmatpush1.msra.mxu0 0.0
        %885 = vmatprep.subr.mxu0 0.0
        %886 = vmatpush1.msra.mxu0 0.0
        %887 = vmatprep.subr.mxu0 0.0
        %888 = vmatpush1.msra.mxu0 0.0
        %889 = vmatprep.subr.mxu0 0.0
        %890 = vmatpush1.msra.mxu0 0.0
        %891 = vmatprep.subr.mxu0 0.0
        %892 = vmatpush1.msra.mxu0 0.0
        %893 = vmatprep.subr.mxu0 0.0
        %894 = vmatpush1.msra.mxu0 0.0
        %895 = vmatprep.subr.mxu0 0.0
        %896 = vmatpush1.msra.mxu0 0.0
        %897 = vmatprep.subr.mxu0 0.0
        %898 = vmatpush1.msra.mxu0 0.0
        %899 = vmatprep.subr.mxu0 %v709
        %900 = vmatpush1.msra.mxu0 %v706
        %901 = vmatprep.subr.mxu0 %v632
        %902 = vmatpush1.msra.mxu0 %v631
        %903 = vmatprep.subr.mxu0 0.0
        %904 = vmatpush2.msra.mxu0 0.0
        %905 = vmatprep.subr.mxu0 0.0
        %906 = vmatpush2.msra.mxu0 0.0
        %907 = vmatprep.subr.mxu0 0.0
        %908 = vmatpush2.msra.mxu0 0.0
        %909 = vmatprep.subr.mxu0 0.0
        %910 = vmatpush2.msra.mxu0 0.0
        %911 = vmatprep.subr.mxu0 0.0
        %912 = vmatpush2.msra.mxu0 0.0
        %913 = vmatprep.subr.mxu0 0.0
        %914 = vmatpush2.msra.mxu0 0.0
        %915 = vmatprep.subr.mxu0 0.0
        %916 = vmatpush2.msra.mxu0 0.0
        %917 = vmatprep.subr.mxu0 0.0
        %918 = vmatpush2.msra.mxu0 0.0
        %919 = vmatprep.subr.mxu0 0.0
        %920 = vmatpush2.msra.mxu0 0.0
        %921 = vmatprep.subr.mxu0 0.0
        %922 = vmatpush2.msra.mxu0 0.0
        %923 = vmatprep.subr.mxu0 0.0
        %924 = vmatpush2.msra.mxu0 0.0
        %925 = vmatprep.subr.mxu0 0.0
        %926 = vmatpush2.msra.mxu0 0.0
        %927 = vmatprep.subr.mxu0 0.0
        %928 = vmatpush2.msra.mxu0 0.0
        %929 = vmatprep.subr.mxu0 0.0
        %930 = vmatpush2.msra.mxu0 0.0
        %931 = vmatprep.subr.mxu0 0.0
        %932 = vmatpush2.msra.mxu0 0.0
        %933 = vmatprep.subr.mxu0 0.0
        %934 = vmatpush2.msra.mxu0 0.0
        %935 = vmatprep.mubr.f32.mxu0 0.0
        %936 = vmatmul.mubr.f32.gmra.mxu0 %v687
        %v937 = vpop.f32.mrf.mxu0
        %v938 = vadd.f32 %v664, %v937
        %v939 = vpop.f32.mrf.mxu0
        %v940 = vadd.f32 %v668, %v939
        %941 = vmatprep.mubr.f32.mxu0 0.0
        %942 = vmatmul.mubr.f32.gmra.mxu0 %v690
        %v943 = vpop.f32.mrf.mxu0
        %v944 = vadd.f32 %v664, %v943
        %v945 = vpop.f32.mrf.mxu0
        %v946 = vadd.f32 %v668, %v945
        %947 = vdwg.mxu0
        %948 = vmatprep.subr.mxu0 0.0
        %949 = vmatpush1.msra.mxu0 0.0
        %950 = vmatprep.subr.mxu0 0.0
        %951 = vmatpush1.msra.mxu0 0.0
        %952 = vmatprep.subr.mxu0 0.0
        %953 = vmatpush1.msra.mxu0 0.0
        %954 = vmatprep.subr.mxu0 0.0
        %955 = vmatpush1.msra.mxu0 0.0
        %956 = vmatprep.subr.mxu0 0.0
        %957 = vmatpush1.msra.mxu0 0.0
        %958 = vmatprep.subr.mxu0 0.0
        %959 = vmatpush1.msra.mxu0 0.0
        %960 = vmatprep.subr.mxu0 0.0
        %961 = vmatpush1.msra.mxu0 0.0
        %962 = vmatprep.subr.mxu0 0.0
        %963 = vmatpush1.msra.mxu0 0.0
        %964 = vmatprep.subr.mxu0 0.0
        %965 = vmatpush1.msra.mxu0 0.0
        %966 = vmatprep.subr.mxu0 0.0
        %967 = vmatpush1.msra.mxu0 0.0
        %968 = vmatprep.subr.mxu0 0.0
        %969 = vmatpush1.msra.mxu0 0.0
        %970 = vmatprep.subr.mxu0 0.0
        %971 = vmatpush1.msra.mxu0 0.0
        %972 = vmatprep.subr.mxu0 0.0
        %973 = vmatpush1.msra.mxu0 0.0
        %974 = vmatprep.subr.mxu0 0.0
        %975 = vmatpush1.msra.mxu0 0.0
        %976 = vmatprep.subr.mxu0 %v715
        %977 = vmatpush1.msra.mxu0 %v712
        %978 = vmatprep.subr.mxu0 %v634
        %979 = vmatpush1.msra.mxu0 %v633
        %980 = vmatprep.subr.mxu0 0.0
        %981 = vmatpush2.msra.mxu0 0.0
        %982 = vmatprep.subr.mxu0 0.0
        %983 = vmatpush2.msra.mxu0 0.0
        %984 = vmatprep.subr.mxu0 0.0
        %985 = vmatpush2.msra.mxu0 0.0
        %986 = vmatprep.subr.mxu0 0.0
        %987 = vmatpush2.msra.mxu0 0.0
        %988 = vmatprep.subr.mxu0 0.0
        %989 = vmatpush2.msra.mxu0 0.0
        %990 = vmatprep.subr.mxu0 0.0
        %991 = vmatpush2.msra.mxu0 0.0
        %992 = vmatprep.subr.mxu0 0.0
        %993 = vmatpush2.msra.mxu0 0.0
        %994 = vmatprep.subr.mxu0 0.0
        %995 = vmatpush2.msra.mxu0 0.0
        %996 = vmatprep.subr.mxu0 0.0
        %997 = vmatpush2.msra.mxu0 0.0
        %998 = vmatprep.subr.mxu0 0.0
        %999 = vmatpush2.msra.mxu0 0.0
        %1000 = vmatprep.subr.mxu0 0.0
        %1001 = vmatpush2.msra.mxu0 0.0
        %1002 = vmatprep.subr.mxu0 0.0
        %1003 = vmatpush2.msra.mxu0 0.0
        %1004 = vmatprep.subr.mxu0 0.0
        %1005 = vmatpush2.msra.mxu0 0.0
        %1006 = vmatprep.subr.mxu0 0.0
        %1007 = vmatpush2.msra.mxu0 0.0
        %1008 = vmatprep.subr.mxu0 0.0
        %1009 = vmatpush2.msra.mxu0 0.0
        %1010 = vmatprep.subr.mxu0 0.0
        %1011 = vmatpush2.msra.mxu0 0.0
        %1012 = vmatprep.mubr.f32.mxu0 0.0
        %1013 = vmatmul.mubr.f32.gmra.mxu0 %v687
        %v1014 = vpop.f32.mrf.mxu0
        %v1015 = vadd.f32 %v672, %v1014
        %v1016 = vpop.f32.mrf.mxu0
        %v1017 = vadd.f32 %v676, %v1016
        %1018 = vmatprep.mubr.f32.mxu0 0.0
        %1019 = vmatmul.mubr.f32.gmra.mxu0 %v690
        %v1020 = vpop.f32.mrf.mxu0
        %v1021 = vadd.f32 %v672, %v1020
        %v1022 = vpop.f32.mrf.mxu0
        %v1023 = vadd.f32 %v676, %v1022
        %1024 = vdwg.mxu0
        %1025 = vst [vmem:[%s285] sm:$0xff] %v784
        %1026 = vst [vmem:[%s285 + $0x8] sm:$0xff] %v786
        %1027 = vst [vmem:[%s285 + $0x10] sm:$0xff] %v861
        %1028 = vst [vmem:[%s285 + $0x18] sm:$0xff] %v863
        %1029 = vst [vmem:[%s285 + $0x20] sm:$0xff] %v938
        %1030 = vst [vmem:[%s285 + $0x28] sm:$0xff] %v940
        %1031 = vst [vmem:[%s285 + $0x30] sm:$0xff] %v1015
        %1032 = vst [vmem:[%s285 + $0x38] sm:$0xff] %v1017
        %1033 = vst [vmem:[%s285 + $0x40] sm:$0xff] %v790
        %1034 = vst [vmem:[%s285 + $0x48] sm:$0xff] %v792
        %1035 = vst [vmem:[%s285 + $0x50] sm:$0xff] %v867
        %1036 = vst [vmem:[%s285 + $0x58] sm:$0xff] %v869
        %1037 = vst [vmem:[%s285 + $0x60] sm:$0xff] %v944
        %1038 = vst [vmem:[%s285 + $0x68] sm:$0xff] %v946
        %1039 = vst [vmem:[%s285 + $0x70] sm:$0xff] %v1021
        %1040 = vst [vmem:[%s285 + $0x78] sm:$0xff] %v1023
        %s1041 = sand.u32 %s142, 1
        %s1042 = scalar_lea.sflag [#allocation4], %s1041
        %s1043 = sand.u32 %s142, 1
        %s1044 = smul.addr %s1043, 128
        %s1045 = scalar_lea.vmem [#allocation10], %s1044
        // Predicated region
        $region57: #{tpu_custom_call.1} parent=39 // pred_check
          %p1046 = pneg %p152
        $region58: #{tpu_custom_call.1} parent=39 // pred_check_branch
          %1048 = sbr.rel (%p1046) target = $region60
        $region59: #{tpu_custom_call.1} parent=39 // pred_region
          %s1049 = smul.u32 2, %s24
          %s1051 = ssub.s32 2048, 2048
          %1052 = vsyncadd %s1042, %s1051
          %s1053 = smul.addr %s1049, 8
          %s1054 = smul.addr %s1053, 128
          %s1055 = scalar_lea.hbm %s5, %s1054
          %s1056 = sshll.u32 %s1045, 4
          %s1057 = int_to_ptr.vmem [resolvable:$true] %s1056
          %1062 = dma.vmem_to_hbm [thread:$0]  %s1057, 2048, %s1055, %s1042, 1024, 1024, 64
        $region60: #{tpu_custom_call.1} parent=39 // pred_fallthru
          _
      $region40: #{tpu_custom_call.1} parent=5 // pred_fallthru
        _
      %p1063 = scmp.le.s32.totalorder 2, %s19
      // Predicated region
      $region61: #{tpu_custom_call.1} parent=5 // pred_check
        %p1064 = pneg %p1063
      $region62: #{tpu_custom_call.1} parent=5 // pred_check_branch
        %1066 = sbr.rel (%p1064) target = $region64
      $region63: #{tpu_custom_call.1} parent=5 // pred_region
        %s1067 = ssub.s32 %s19, 2
        // Predicated region
        $region65: #{tpu_custom_call.1} parent=63 // pred_check
          %p1068 = pneg %p158
        $region66: #{tpu_custom_call.1} parent=63 // pred_check_branch
          %1070 = sbr.rel (%p1068) target = $region68
        $region67: #{tpu_custom_call.1} parent=63 // pred_region
          %s1071 = sand.u32 %s143, 1
          %s1072 = scalar_lea.sflag [#allocation4], %s1071
          %s1073 = sand.u32 %s143, 1
          %s1074 = smul.addr %s1073, 128
          %s1075 = scalar_lea.vmem [#allocation10], %s1074
          %1076 = dma.done %s1072, 2048
        $region68: #{tpu_custom_call.1} parent=63 // pred_fallthru
          _
      $region64: #{tpu_custom_call.1} parent=5 // pred_fallthru
        _
    $region6: #{tpu_custom_call.1} parent=1 // loop_footer
      %s23 = sadd.s32 1, %s19
    $region7: #{tpu_custom_call.1} parent=1 // loop_footer_branch
      %18 = sbr.rel target = $region3
    $region8: #{tpu_custom_call.1} parent=1 // loop_exit
      _
    %1077 = vsyncpa [#allocation3], 1
    %s1078 = scalar_lea.sflag [#allocation3], 1
    %1079 = vsyncpa %s1078, 1
    %1080 = vsyncpa [#allocation6], 1
    %1081 = vsyncpa [#allocation9], 1
    %1082 = vsyncpa [#allocation4], 1
    %s1083 = scalar_lea.sflag [#allocation4], 1
    %1084 = vsyncpa %s1083, 1

</llo_original>
